<compile_context>
chip_gen: v7x
topology: tpu7x:2x2x1
jax: 0.10.0
libtpu: 0.0.40
codegen_flags: <defaults>
</compile_context>

<pallas_src>
import functools
import math

import jax
import jax.numpy as jnp
from jax.experimental import pallas as pl
from jax.experimental.pallas import tpu as pltpu

# Fits under default scoped VMEM on v5e/v6e and well under v7x's 64 MiB physical.
_VMEM_LIMIT_BYTES = 32 * 1024 * 1024


def _pick_tile(dim, target, align):
    """Largest `align`-multiple divisor of `dim` that is <= target.

    Falls back to the full dim (always a legal block, no padding).  NOTE: for a
    pathologically non-factorable dim this produces one large block; transformer
    dims (multiples of 8/128) never hit that case, but keep an eye on VMEM if
    you feed odd shapes.
    """
    if dim <= target:
        return dim
    t = target - (target % align)
    while t >= align:
        if dim % t == 0:
            return t
        t -= align
    return dim


# --------------------------------------------------------------------------
# Kernel 1: tiled matmul + bias:  (M,K) @ (K,N) + b  ->  (M,N)
# --------------------------------------------------------------------------
def _linear_kernel(x_ref, w_ref, b_ref, o_ref, acc_ref):
    @pl.when(pl.program_id(2) == 0)
    def _():
        acc_ref[...] = jnp.zeros_like(acc_ref)

    acc_ref[...] += jnp.dot(
        x_ref[...], w_ref[...], preferred_element_type=jnp.float32
    )

    @pl.when(pl.program_id(2) == pl.num_programs(2) - 1)
    def _():
        o_ref[...] = (acc_ref[...] + b_ref[...].astype(jnp.float32)).astype(
            o_ref.dtype
        )


def linear(x, w, b, *, tm_target=512, tn_target=512, tk_target=512):
    M, K = x.shape
    K2, N = w.shape
    assert K == K2 and b.shape == (N,)
    tm = _pick_tile(M, tm_target, 8)     # sublane-aligned (or full M)
    tn = _pick_tile(N, tn_target, 128)   # lane-aligned    (or full N)
    tk = _pick_tile(K, tk_target, 128)   # lane-aligned    (or full K)
    # Keep at least one parallel grid axis with >=2 iterations so both
    # TensorCores of dual-core chips (v7x) get work on small layers.
    if M // tm == 1 and N // tn == 1 and tm >= 16 and tm % 16 == 0:
        tm //= 2
    b2 = b.reshape(1, N)
    grid = (M // tm, N // tn, K // tk)
    return pl.pallas_call(
        _linear_kernel,
        out_shape=jax.ShapeDtypeStruct((M, N), x.dtype),
        grid_spec=pltpu.PrefetchScalarGridSpec(
            num_scalar_prefetch=0,
            grid=grid,
            in_specs=[
                pl.BlockSpec((tm, tk), lambda i, j, k: (i, k)),
                pl.BlockSpec((tk, tn), lambda i, j, k: (k, j)),
                pl.BlockSpec((1, tn), lambda i, j, k: (0, j)),
            ],
            out_specs=pl.BlockSpec((tm, tn), lambda i, j, k: (i, j)),
            scratch_shapes=[pltpu.VMEM((tm, tn), jnp.float32)],
        ),
        compiler_params=pltpu.CompilerParams(
            dimension_semantics=("parallel", "parallel", "arbitrary"),
            vmem_limit_bytes=_VMEM_LIMIT_BYTES,
        ),
    )(x, w, b2)


# --------------------------------------------------------------------------
# Kernel 2: flash-style causal attention, all heads per grid step, reading the
# fused QKV slab and writing the head-concatenated context slab directly.
# --------------------------------------------------------------------------
def _flash_mha_kernel(*refs, scale, tq, tk, num_heads, head_dim, d_out, split):
    if split:
        # q / k / v column sections delivered as three separate blocks.
        q_ref, k_ref, v_ref, o_ref, m_sc, l_sc, acc_sc = refs
        k_base, v_base = 0, 0
    else:
        # Full-width blocks: q columns at [0, d_out), k at [d_out, 2*d_out),
        # v at [2*d_out, 3*d_out).
        q_ref, kv_ref, o_ref, m_sc, l_sc, acc_sc = refs
        k_ref = kv_ref
        v_ref = kv_ref
        k_base, v_base = d_out, 2 * d_out

    qi = pl.program_id(1)
    ki = pl.program_id(2)

    @pl.when(ki == 0)
    def _():
        m_sc[...] = jnp.full_like(m_sc, -jnp.inf)
        l_sc[...] = jnp.zeros_like(l_sc)
        acc_sc[...] = jnp.zeros_like(acc_sc)

    q_scale = jnp.asarray(scale, dtype=q_ref.dtype)

    def process(apply_mask):
        if apply_mask:
            # Mask built once per step (only on diagonal blocks), shared by all
            # heads.  -1e30 (not -inf) is safe because kv block 0 is always
            # processed first, so every row's running max is finite before any
            # fully-masked row can appear and exp(-1e30 - m) underflows to 0.
            row = qi * tq + jax.lax.broadcasted_iota(jnp.int32, (tq, tk), 0)
            col = ki * tk + jax.lax.broadcasted_iota(jnp.int32, (tq, tk), 1)
            keep = col <= row
        for h in range(num_heads):
            hd = slice(h * head_dim, (h + 1) * head_dim)
            # Softmax scale folded into the (tq, Dh) q tile; operands stay in
            # their native dtype for the MXU, accumulation is f32.
            q_h = q_ref[:, hd] * q_scale
            k_h = k_ref[:, k_base + h * head_dim : k_base + (h + 1) * head_dim]
            s = jax.lax.dot_general(
                q_h, k_h, (((1,), (1,)), ((), ())),
                preferred_element_type=jnp.float32,
            )
            if apply_mask:
                s = jnp.where(keep, s, jnp.float32(-1e30))
            m_prev = m_sc[:, h : h + 1]
            m_new = jnp.maximum(m_prev, s.max(axis=-1, keepdims=True))
            alpha = jnp.exp(m_prev - m_new)
            p = jnp.exp(s - m_new)
            l_sc[:, h : h + 1] = (
                alpha * l_sc[:, h : h + 1] + p.sum(axis=-1, keepdims=True)
            )
            v_h = v_ref[:, v_base + h * head_dim : v_base + (h + 1) * head_dim]
            acc_sc[h] = alpha * acc_sc[h] + jnp.dot(
                p.astype(v_h.dtype), v_h, preferred_element_type=jnp.float32
            )
            m_sc[:, h : h + 1] = m_new

    in_range = ki * tk <= qi * tq + (tq - 1)       # block touches lower triangle
    needs_mask = ki * tk + (tk - 1) > qi * tq      # block straddles the diagonal

    @pl.when(in_range & needs_mask)
    def _():
        process(apply_mask=True)

    @pl.when(in_range & jnp.logical_not(needs_mask))
    def _():
        process(apply_mask=False)

    @pl.when(ki == pl.num_programs(2) - 1)
    def _():
        outs = []
        for h in range(num_heads):
            inv_l = pl.reciprocal(l_sc[:, h : h + 1], approx=True)
            outs.append(acc_sc[h] * inv_l)
        # Single lane-dense (tq, d_out) store, heads concatenated in-register.
        o_ref[...] = jnp.concatenate(outs, axis=-1).astype(o_ref.dtype)


def causal_mha(qkv, *, num_heads, d_out, tq_target=512, tk_target=256):
    B, T, width = qkv.shape
    assert width == 3 * d_out and d_out % num_heads == 0
    head_dim = d_out // num_heads
    tq = _pick_tile(T, tq_target, 8)
    tk = _pick_tile(T, tk_target, 8)
    scale = 1.0 / math.sqrt(head_dim)

    def q_map(col):
        return lambda b, qi, ki: (b, qi, col)

    def kv_map(col):
        def index_map(b, qi, ki):
            # Clamp to the last causally-relevant kv block: steps beyond the
            # diagonal revisit the already-resident block -> no new DMA.
            last_valid = (qi * tq + tq - 1) // tk
            return (b, jnp.minimum(ki, last_valid), col)
        return index_map

    split = (d_out % 128 == 0)
    if split:
        # Lane-aligned head sections: zero over-fetch, three column blocks.
        in_specs = [
            pl.BlockSpec((None, tq, d_out), q_map(0)),
            pl.BlockSpec((None, tk, d_out), kv_map(1)),
            pl.BlockSpec((None, tk, d_out), kv_map(2)),
        ]
        operands = (qkv, qkv, qkv)
    else:
        # d_out not a multiple of 128: fall back to full-width blocks (q is
        # fetched once per (b, q-tile); the kv stream carries a 1.5x over-fetch,
        # still far cheaper than separate transpose passes over HBM).
        in_specs = [
            pl.BlockSpec((None, tq, 3 * d_out), q_map(0)),
            pl.BlockSpec((None, tk, 3 * d_out), kv_map(0)),
        ]
        operands = (qkv, qkv)

    kernel = functools.partial(
        _flash_mha_kernel, scale=scale, tq=tq, tk=tk, num_heads=num_heads,
        head_dim=head_dim, d_out=d_out, split=split,
    )
    grid = (B, T // tq, T // tk)
    return pl.pallas_call(
        kernel,
        out_shape=jax.ShapeDtypeStruct((B, T, d_out), qkv.dtype),
        grid_spec=pltpu.PrefetchScalarGridSpec(
            num_scalar_prefetch=0,
            grid=grid,
            in_specs=in_specs,
            out_specs=pl.BlockSpec((None, tq, d_out), lambda b, qi, ki: (b, qi, 0)),
            scratch_shapes=[
                pltpu.VMEM((tq, num_heads), jnp.float32),             # running max m
                pltpu.VMEM((tq, num_heads), jnp.float32),             # running denom l
                pltpu.VMEM((num_heads, tq, head_dim), jnp.float32),   # accumulator
            ],
        ),
        compiler_params=pltpu.CompilerParams(
            dimension_semantics=("parallel", "parallel", "arbitrary"),
            vmem_limit_bytes=_VMEM_LIMIT_BYTES,
        ),
    )(*operands)


# --------------------------------------------------------------------------
# Full MultiHeadAttention forward (matches the PyTorch module in eval mode).
# --------------------------------------------------------------------------
def multi_head_attention(x, w_qkv, b_qkv, w_proj, b_proj, num_heads):
    B, T, d_in = x.shape
    d_out = w_proj.shape[1]
    assert d_out % num_heads == 0
    assert w_qkv.shape == (d_in, 3 * d_out)

    # Fused QKV projection, like nn.Linear(d_in, 3*d_out).
    qkv = linear(x.reshape(B * T, d_in), w_qkv, b_qkv)        # (B*T, 3*d_out)
    qkv = qkv.reshape(B, T, 3 * d_out)                        # free reshape

    # Causal flash attention straight off the fused slab; output is already the
    # head-concatenated (B, T, d_out) layout -> no transposes anywhere.
    ctx = causal_mha(qkv, num_heads=num_heads, d_out=d_out)   # (B, T, d_out)

    # Output projection.
    out = linear(ctx.reshape(B * T, d_out), w_proj, b_proj)
    return out.reshape(B, T, d_out)

# TODO(synk): training-mode attention dropout not implemented; forward matches
# the module in eval mode (dropout_p = 0.0).


# --------------------------------------------------------------------------
# Pure-JAX reference.
# --------------------------------------------------------------------------
def mha_ref(x, w_qkv, b_qkv, w_proj, b_proj, num_heads):
    B, T, d_in = x.shape
    d_out = w_proj.shape[1]
    Dh = d_out // num_heads
    hp = jax.lax.Precision.HIGHEST
    qkv = jnp.einsum("btd,df->btf", x, w_qkv, precision=hp) + b_qkv
    qkv = qkv.reshape(B, T, 3, num_heads, Dh).transpose(2, 0, 3, 1, 4)
    q, k, v = qkv[0], qkv[1], qkv[2]
    s = jnp.einsum("bhqd,bhkd->bhqk", q, k, precision=hp) / math.sqrt(Dh)
    mask = jnp.tril(jnp.ones((T, T), dtype=bool))
    s = jnp.where(mask, s, -jnp.inf)
    p = jax.nn.softmax(s, axis=-1)
    ctx = jnp.einsum("bhqk,bhkd->bhqd", p, v, precision=hp)
    ctx = ctx.transpose(0, 2, 1, 3).reshape(B, T, d_out)
    return jnp.einsum("btd,de->bte", ctx, w_proj, precision=hp) + b_proj


if __name__ == "__main__":
    B, T = 2, 8
    d_in, d_out, num_heads = 32, 32, 4   # head_dim = 8, context_length = 8

    key = jax.random.PRNGKey(0)
    k1, k2, k3, k4 = jax.random.split(key, 4)
    x = jax.random.normal(k1, (B, T, d_in), dtype=jnp.float32)
    w_qkv = jax.random.normal(k2, (d_in, 3 * d_out), jnp.float32) / math.sqrt(d_in)
    b_qkv = jnp.zeros((3 * d_out,), jnp.float32)          # qkv_bias=False
    w_proj = jax.random.normal(k3, (d_out, d_out), jnp.float32) / math.sqrt(d_out)
    b_proj = 0.1 * jax.random.normal(k4, (d_out,), jnp.float32)

    y = multi_head_attention(x, w_qkv, b_qkv, w_proj, b_proj, num_heads)
    y = jax.block_until_ready(y)

    y_ref = mha_ref(x, w_qkv, b_qkv, w_proj, b_proj, num_heads)
    assert y.shape == (B, T, d_out) and y.dtype == x.dtype
    assert jnp.allclose(y, y_ref, atol=2e-2, rtol=2e-2), "mismatch vs reference"

    print("KERNEL_OK")
</pallas_src>

<mosaic_0001>
module attributes {stable_mosaic.version = 11 : i64} {
  func.func @_linear_kernel(%arg0: i32, %arg1: i32, %arg2: i32, %arg3: memref<8x32xf32, #tpu.memory_space<vmem>>, %arg4: memref<32x96xf32, #tpu.memory_space<vmem>>, %arg5: memref<1x96xf32, #tpu.memory_space<vmem>>, %arg6: memref<8x96xf32, #tpu.memory_space<vmem>>, %arg7: memref<8x96xf32, #tpu.memory_space<vmem>>) attributes {dimension_semantics = [#tpu.dimension_semantics<parallel>, #tpu.dimension_semantics<parallel>, #tpu.dimension_semantics<arbitrary>], iteration_bounds = array<i64: 2, 1, 1>, scalar_prefetch = 0 : i64, scratch_operands = 1 : i64, tpu.core_type = #tpu.core_type<tc>, window_params = [{transform_indices = @transform_0, window_bounds = array<i64: 8, 32>}, {transform_indices = @transform_1, window_bounds = array<i64: 32, 96>}, {transform_indices = @transform_2, window_bounds = array<i64: 1, 96>}, {transform_indices = @transform_3, window_bounds = array<i64: 8, 96>}]} {
    %c0_i32 = arith.constant 0 : i32
    %0 = arith.cmpi eq, %arg2, %c0_i32 : i32
    %1 = arith.extui %0 : i1 to i32
    %c0_i32_0 = arith.constant 0 : i32
    %2 = arith.cmpi ne, %1, %c0_i32_0 : i32
    scf.if %2 {
      %cst_10 = arith.constant 0.000000e+00 : f32
      %12 = vector.broadcast %cst_10 : f32 to vector<8x96xf32>
      %c0_11 = arith.constant 0 : index
      %c0_12 = arith.constant 0 : index
      %13 = vector.load %arg7[%c0_11, %c0_12] : memref<8x96xf32, #tpu.memory_space<vmem>>, vector<8x96xf32>
      tpu.vector_store %arg7[%c0_11, %c0_12], %12 {strides = array<i32>} : memref<8x96xf32, #tpu.memory_space<vmem>>, vector<8x96xf32>,
    } else {
    }
    %c0 = arith.constant 0 : index
    %c0_1 = arith.constant 0 : index
    %3 = vector.load %arg7[%c0, %c0_1] : memref<8x96xf32, #tpu.memory_space<vmem>>, vector<8x96xf32>
    %c0_2 = arith.constant 0 : index
    %c0_3 = arith.constant 0 : index
    %4 = vector.load %arg3[%c0_2, %c0_3] : memref<8x32xf32, #tpu.memory_space<vmem>>, vector<8x32xf32>
    %c0_4 = arith.constant 0 : index
    %c0_5 = arith.constant 0 : index
    %5 = vector.load %arg4[%c0_4, %c0_5] : memref<32x96xf32, #tpu.memory_space<vmem>>, vector<32x96xf32>
    %cst = arith.constant dense<0.000000e+00> : vector<8x96xf32>
    %6 = tpu.matmul %4, %5, %cst {dimension_numbers = #tpu.dot_dimension_numbers<[1], [0], [0], [1], [0, 0, 1, 1], [], []>} : vector<8x32xf32>, vector<32x96xf32>, vector<8x96xf32> -> vector<8x96xf32>
    %7 = arith.addf %3, %6 : vector<8x96xf32>
    %c0_6 = arith.constant 0 : index
    %c0_7 = arith.constant 0 : index
    %8 = vector.load %arg7[%c0_6, %c0_7] : memref<8x96xf32, #tpu.memory_space<vmem>>, vector<8x96xf32>
    tpu.vector_store %arg7[%c0_6, %c0_7], %7 {strides = array<i32>} : memref<8x96xf32, #tpu.memory_space<vmem>>, vector<8x96xf32>,
    %c0_i32_8 = arith.constant 0 : i32
    %9 = arith.cmpi eq, %arg2, %c0_i32_8 : i32
    %10 = arith.extui %9 : i1 to i32
    %c0_i32_9 = arith.constant 0 : i32
    %11 = arith.cmpi ne, %10, %c0_i32_9 : i32
    scf.if %11 {
      %c0_10 = arith.constant 0 : index
      %c0_11 = arith.constant 0 : index
      %12 = vector.load %arg7[%c0_10, %c0_11] : memref<8x96xf32, #tpu.memory_space<vmem>>, vector<8x96xf32>
      %c0_12 = arith.constant 0 : index
      %c0_13 = arith.constant 0 : index
      %13 = vector.load %arg5[%c0_12, %c0_13] : memref<1x96xf32, #tpu.memory_space<vmem>>, vector<1x96xf32>
      %14 = vector.broadcast %13 : vector<1x96xf32> to vector<8x96xf32>
      %15 = arith.addf %12, %14 : vector<8x96xf32>
      %c0_14 = arith.constant 0 : index
      %c0_15 = arith.constant 0 : index
      %16 = vector.load %arg6[%c0_14, %c0_15] : memref<8x96xf32, #tpu.memory_space<vmem>>, vector<8x96xf32>
      tpu.vector_store %arg6[%c0_14, %c0_15], %15 {strides = array<i32>} : memref<8x96xf32, #tpu.memory_space<vmem>>, vector<8x96xf32>,
    } else {
    }
    return
  }
  func.func @transform_0(%arg0: i32, %arg1: i32, %arg2: i32) -> (i32, i32) {
    %c0_i32 = arith.constant 0 : i32
    return %arg0, %arg2 : i32, i32
  }
  func.func @transform_1(%arg0: i32, %arg1: i32, %arg2: i32) -> (i32, i32) {
    %c0_i32 = arith.constant 0 : i32
    return %arg2, %arg1 : i32, i32
  }
  func.func @transform_2(%arg0: i32, %arg1: i32, %arg2: i32) -> (i32, i32) {
    %c0_i32 = arith.constant 0 : i32
    %c0_i32_0 = arith.constant 0 : i32
    return %c0_i32, %arg1 : i32, i32
  }
  func.func @transform_3(%arg0: i32, %arg1: i32, %arg2: i32) -> (i32, i32) {
    %c0_i32 = arith.constant 0 : i32
    return %arg0, %arg1 : i32, i32
  }
}

</mosaic_0001>

<llo_original>
// kernel: tpu_custom_call.1
$region0: #{tpu_custom_call.1}
  #allocation0 [shape = 'u32[]', space=smem, size = 0x4, offset = 0x4, fixed_abs, tag = 'smem constant byte address 0x4 - core index']
  #allocation1 [shape = 'u32[144,128]{1,0:T(1,128)}', space=vmem, size = 0x12000, scoped, tag = 'internal scratch']
  #allocation2 [shape = 'f32[8,96]{1,0:T(8,128)}', space=vmem, size = 0x1000, scoped, tag = 'scratch operand']
  %s0 = inlined_call_operand.hbm [shape: f32[16,32], index: 0, kind: input, shape index: {}]
  %s1 = inlined_call_operand.hbm [shape: f32[32,96], index: 1, kind: input, shape index: {}]
  %s2 = inlined_call_operand.vmem [shape: f32[1,96], index: 2, kind: input, shape index: {}]
  %s3 = inlined_call_operand.hbm [shape: f32[16,96], index: 3, kind: output, shape index: {}]
  %s4 = sld [smem:[#allocation0]]
  $region61: #{tpu_custom_call.1} parent=0
    _
  %s6 = ssub.s32 1, %s4
  %s7 = scalar_select 0, %s6, %s4
  $region1: #{tpu_custom_call.1} parent=0
    #allocation3 [shape = 'u8[8192]{0}', space=vmem, size = 0x2000, scoped, tag = 'input window, operand 0']
    #allocation4 [shape = 's32[2]{0}', space=sflag, size = 0x8, scoped, tag = 'scoped memory for tpu_custom_call.1']
    #allocation5 [shape = 's32[2]{0}', space=sflag, size = 0x8, scoped, tag = 'scoped memory for tpu_custom_call.1']
    #allocation6 [shape = 'u8[16384]{0}', space=vmem, size = 0x4000, scoped, tag = 'input window, operand 1, single buffered']
    #allocation7 [shape = 's32[1]{0}', space=sflag, size = 0x4, scoped, tag = 'scoped memory for tpu_custom_call.1']
    #allocation8 [shape = 'u8[8192]{0}', space=vmem, size = 0x2000, scoped, tag = 'output window, operand 0']
    %8 = vsyncpa [#allocation4], 0
    %s9 = scalar_lea.sflag [#allocation4], 1
    %10 = vsyncpa %s9, 0
    %11 = vsyncpa [#allocation7], 0
    %12 = vsyncpa [#allocation5], 0
    %s13 = scalar_lea.sflag [#allocation5], 1
    %14 = vsyncpa %s13, 0
    loop: start=0, step=1, limit=4
    $region2: #{tpu_custom_call.1} parent=1 // loop_pre_header
      _
    $region3: #{tpu_custom_call.1} parent=1 // loop_header
      %s16 = sphi 0, %s20
      %p17 = scmp.ge.s32.totalorder %s16, 4
      %s23 = sphi 0, %s42
      %s24 = sphi 0, %s38
      %s25 = sphi 0, %s34
      %s26 = sphi 0, %s23
      %s27 = sphi 0, %s24
      %s28 = sphi 0, %s25
      %s29 = sphi 0, %s26
      %s30 = sphi 0, %s27
      %s31 = sphi 0, %s28
      %s47 = sphi 0, %s49
      %s50 = sphi 0, %s47
      %s51 = sphi 0, %s50
      %s67 = sphi 0, %s51
      %s75 = sphi 0, %s77
      %s78 = sphi 0, %s75
      %s79 = sphi 0, %s78
      %s95 = sphi 0, %s79
      %s101 = sphi 0, %s103
      %s104 = sphi 0, %s101
      %s105 = sphi 0, %s104
      %s121 = sphi 0, %s105
      %s129 = sphi 0, %s131
      %s132 = sphi 0, %s129
      %s133 = sphi 0, %s132
      %s149 = sphi 0, %s133
    $region4: #{tpu_custom_call.1} parent=1 // loop_header_branch
      %19 = sbr.rel (%p17) target = $region8
    $region5: #{tpu_custom_call.1} parent=1 // loop_body
      %s21 = ssub.s32 %s16, 1
      %s22 = ssub.s32 %s16, 2
      %s32 = sadd.s32 1, %s25
      %p33 = scmp.ge.s32.totalorder %s32, 1
      %s34 = scalar_select %p33, 0, %s32
      %s35 = sadd.s32 1, %s24
      %s36 = scalar_select %p33, %s35, %s24
      %p37 = scmp.ge.s32.totalorder %s36, 1
      %s38 = scalar_select %p37, 0, %s36
      %s39 = sadd.s32 1, %s23
      %s40 = scalar_select %p37, %s39, %s23
      %p41 = scmp.ge.s32.totalorder %s40, 2
      %s42 = scalar_select %p41, 0, %s40
      %s43 = ssub.s32 %s23, %s42
      %s44 = ssub.s32 %s25, %s34
      %s45 = sor.u32 %s43, %s44
      %p46 = scmp.eq.s32.totalorder %s45, 0
      %s48 = sadd.s32 %s47, 1
      %s49 = scalar_select %p46, %s47, %s48
      %p52 = pneg %p46
      %p53 = scmp.eq.s32.totalorder %s16, 1
      %p54 = por %p52, %p53
      %p55 = scmp.ne.s32.totalorder %s47, %s50
      %p56 = scmp.eq.s32.totalorder %s16, 0
      %p57 = por %p55, %p56
      %p58 = scmp.ne.s32.totalorder %s47, %s50
      %p59 = scmp.eq.s32.totalorder %s21, 1
      %p60 = por %p58, %p59
      %p61 = scmp.ne.s32.totalorder %s50, %s51
      %p62 = scmp.eq.s32.totalorder %s21, 0
      %p63 = por %p61, %p62
      %p64 = scmp.ne.s32.totalorder %s50, %s51
      %p65 = scmp.eq.s32.totalorder %s22, 1
      %p66 = por %p64, %p65
      %p68 = scmp.ne.s32.totalorder %s51, %s67
      %p69 = scmp.eq.s32.totalorder %s22, 0
      %p70 = por %p68, %p69
      %s71 = ssub.s32 %s25, %s34
      %s72 = ssub.s32 %s24, %s38
      %s73 = sor.u32 %s71, %s72
      %p74 = scmp.eq.s32.totalorder %s73, 0
      %s76 = sadd.s32 %s75, 1
      %s77 = scalar_select %p74, %s75, %s76
      %p80 = pneg %p74
      %p81 = scmp.eq.s32.totalorder %s16, 1
      %p82 = por %p80, %p81
      %p83 = scmp.ne.s32.totalorder %s75, %s78
      %p84 = scmp.eq.s32.totalorder %s16, 0
      %p85 = por %p83, %p84
      %p86 = scmp.ne.s32.totalorder %s75, %s78
      %p87 = scmp.eq.s32.totalorder %s21, 1
      %p88 = por %p86, %p87
      %p89 = scmp.ne.s32.totalorder %s78, %s79
      %p90 = scmp.eq.s32.totalorder %s21, 0
      %p91 = por %p89, %p90
      %p92 = scmp.ne.s32.totalorder %s78, %s79
      %p93 = scmp.eq.s32.totalorder %s22, 1
      %p94 = por %p92, %p93
      %p96 = scmp.ne.s32.totalorder %s79, %s95
      %p97 = scmp.eq.s32.totalorder %s22, 0
      %p98 = por %p96, %p97
      %s99 = ssub.s32 %s24, %s38
      %p100 = scmp.eq.s32.totalorder %s99, 0
      %s102 = sadd.s32 %s101, 1
      %s103 = scalar_select %p100, %s101, %s102
      %p106 = pneg %p100
      %p107 = scmp.eq.s32.totalorder %s16, 1
      %p108 = por %p106, %p107
      %p109 = scmp.ne.s32.totalorder %s101, %s104
      %p110 = scmp.eq.s32.totalorder %s16, 0
      %p111 = por %p109, %p110
      %p112 = scmp.ne.s32.totalorder %s101, %s104
      %p113 = scmp.eq.s32.totalorder %s21, 1
      %p114 = por %p112, %p113
      %p115 = scmp.ne.s32.totalorder %s104, %s105
      %p116 = scmp.eq.s32.totalorder %s21, 0
      %p117 = por %p115, %p116
      %p118 = scmp.ne.s32.totalorder %s104, %s105
      %p119 = scmp.eq.s32.totalorder %s22, 1
      %p120 = por %p118, %p119
      %p122 = scmp.ne.s32.totalorder %s105, %s121
      %p123 = scmp.eq.s32.totalorder %s22, 0
      %p124 = por %p122, %p123
      %s125 = ssub.s32 %s23, %s42
      %s126 = ssub.s32 %s24, %s38
      %s127 = sor.u32 %s125, %s126
      %p128 = scmp.eq.s32.totalorder %s127, 0
      %s130 = sadd.s32 %s129, 1
      %s131 = scalar_select %p128, %s129, %s130
      %p134 = pneg %p128
      %p135 = scmp.eq.s32.totalorder %s16, 1
      %p136 = por %p134, %p135
      %p137 = scmp.ne.s32.totalorder %s129, %s132
      %p138 = scmp.eq.s32.totalorder %s16, 0
      %p139 = por %p137, %p138
      %p140 = scmp.ne.s32.totalorder %s129, %s132
      %p141 = scmp.eq.s32.totalorder %s21, 1
      %p142 = por %p140, %p141
      %p143 = scmp.ne.s32.totalorder %s132, %s133
      %p144 = scmp.eq.s32.totalorder %s21, 0
      %p145 = por %p143, %p144
      %p146 = scmp.ne.s32.totalorder %s132, %s133
      %p147 = scmp.eq.s32.totalorder %s22, 1
      %p148 = por %p146, %p147
      %p150 = scmp.ne.s32.totalorder %s133, %s149
      %p151 = scmp.eq.s32.totalorder %s22, 0
      %p152 = por %p150, %p151
      %p153 = scmp.le.s32.totalorder 1, %s16
      %p154 = scmp.lt.s32.totalorder %s16, 3
      %p155 = pnand %p153, %p154
      %p156 = pneg %p155
      // Predicated region
      $region9: #{tpu_custom_call.1} parent=5 // pred_check
        _
      $region10: #{tpu_custom_call.1} parent=5 // pred_check_branch
        %158 = sbr.rel (%p155) target = $region12
      $region11: #{tpu_custom_call.1} parent=5 // pred_region
        %s159 = ssub.s32 %s16, 1
        // Predicated region
        $region13: #{tpu_custom_call.1} parent=11 // pred_check
          %p160 = pneg %p91
        $region14: #{tpu_custom_call.1} parent=11 // pred_check_branch
          %162 = sbr.rel (%p160) target = $region16
        $region15: #{tpu_custom_call.1} parent=11 // pred_region
          %s163 = smul.u32 4, %s28
          %s165 = ssub.s32 512, 512
          %166 = vsyncadd [#allocation7], %s165
          %s167 = sadd.s32 %s27, %s163
          %s168 = smul.addr %s167, 128
          %s169 = scalar_lea.hbm %s1, %s168
          %s170 = sshll.u32 [#allocation6], 4
          %s171 = int_to_ptr.vmem [resolvable:$true] %s170
          %176 = dma.hbm_to_vmem [thread:$0]  %s169, 512, %s171, [#allocation7], 128, 128, 8
        $region16: #{tpu_custom_call.1} parent=11 // pred_fallthru
          _
        // Predicated region
        $region17: #{tpu_custom_call.1} parent=11 // pred_check
          %p177 = pneg %p117
        $region18: #{tpu_custom_call.1} parent=11 // pred_check_branch
          %179 = sbr.rel (%p177) target = $region20
        $region19: #{tpu_custom_call.1} parent=11 // pred_region
          %p180 = scmp.lt.s32.totalorder %s27, 0
          %s181 = scalar_select %p180, %s27, 0
          %s182 = scalar_lea.vmem %s2, %s181
        $region20: #{tpu_custom_call.1} parent=11 // pred_fallthru
          _
      $region12: #{tpu_custom_call.1} parent=5 // pred_fallthru
        _
      %p183 = scmp.lt.s32.totalorder %s16, 2
      // Predicated region
      $region21: #{tpu_custom_call.1} parent=5 // pred_check
        %p184 = pneg %p183
      $region22: #{tpu_custom_call.1} parent=5 // pred_check_branch
        %186 = sbr.rel (%p184) target = $region24
      $region23: #{tpu_custom_call.1} parent=5 // pred_region
        // Predicated region
        $region25: #{tpu_custom_call.1} parent=23 // pred_check
          %p187 = pneg %p57
        $region26: #{tpu_custom_call.1} parent=23 // pred_check_branch
          %189 = sbr.rel (%p187) target = $region28
        $region27: #{tpu_custom_call.1} parent=23 // pred_region
          %s190 = sand.u32 %s47, 1
          %s191 = scalar_lea.sflag [#allocation4], %s190
          %s192 = sand.u32 %s47, 1
          %s193 = smul.addr %s192, 8
          %s194 = scalar_lea.vmem [#allocation3], %s193
          %s196 = ssub.s32 128, 128
          %197 = vsyncadd %s191, %s196
          %s198 = sadd.s32 %s25, %s23
          %s199 = smul.addr %s198, 128
          %s200 = scalar_lea.hbm %s0, %s199
          %s202 = sshll.u32 %s194, 4
          %s203 = int_to_ptr.vmem [resolvable:$true] %s202
          %205 = dma.hbm_to_vmem [thread:$0]  %s200, 128, %s203, %s191
        $region28: #{tpu_custom_call.1} parent=23 // pred_fallthru
          _
      $region24: #{tpu_custom_call.1} parent=5 // pred_fallthru
        _
      %p206 = scmp.le.s32.totalorder 1, %s16
      %p207 = scmp.lt.s32.totalorder %s16, 3
      %p208 = pnand %p206, %p207
      %p209 = pneg %p208
      // Predicated region
      $region29: #{tpu_custom_call.1} parent=5 // pred_check
        _
      $region30: #{tpu_custom_call.1} parent=5 // pred_check_branch
        %211 = sbr.rel (%p208) target = $region32
      $region31: #{tpu_custom_call.1} parent=5 // pred_region
        %s212 = ssub.s32 %s16, 1
        %s213 = sand.u32 %s50, 1
        %s214 = scalar_lea.sflag [#allocation4], %s213
        %s215 = sand.u32 %s50, 1
        %s216 = smul.addr %s215, 8
        %s217 = scalar_lea.vmem [#allocation3], %s216
        // Predicated region
        $region33: #{tpu_custom_call.1} parent=31 // pred_check
          %p218 = pneg %p63
        $region34: #{tpu_custom_call.1} parent=31 // pred_check_branch
          %220 = sbr.rel (%p218) target = $region36
        $region35: #{tpu_custom_call.1} parent=31 // pred_region
          %221 = dma.done %s214, 128
        $region36: #{tpu_custom_call.1} parent=31 // pred_fallthru
          _
        // Predicated region
        $region37: #{tpu_custom_call.1} parent=31 // pred_check
          %p222 = pneg %p91
        $region38: #{tpu_custom_call.1} parent=31 // pred_check_branch
          %224 = sbr.rel (%p222) target = $region40
        $region39: #{tpu_custom_call.1} parent=31 // pred_region
          %225 = dma.done [#allocation7], 512
        $region40: #{tpu_custom_call.1} parent=31 // pred_fallthru
          _
        %s226 = sand.u32 %s50, 1
        %s227 = scalar_lea.sflag [#allocation4], %s226
        %s228 = sand.u32 %s50, 1
        %s229 = smul.addr %s228, 8
        %s230 = scalar_lea.vmem [#allocation3], %s229
        %p231 = pneg %p63
        %p232 = pneg %p60
        %p233 = pneg %p91
        %p234 = pneg %p88
        %p235 = scmp.lt.s32.totalorder %s27, 0
        %s236 = scalar_select %p235, %s27, 0
        %s237 = scalar_lea.vmem %s2, %s236
        %p238 = pneg %p117
        %p239 = pneg %p114
        %p240 = pneg %p145
        %p241 = pneg %p142
        %s242 = sand.u32 %s132, 1
        %s243 = scalar_lea.sflag [#allocation5], %s242
        %s244 = sand.u32 %s132, 1
        %s245 = smul.addr %s244, 8
        %s246 = scalar_lea.vmem [#allocation8], %s245
        %s247 = smul.u32 4, %s28
        %p248 = scmp.lt.s32.totalorder %s27, 0
        %s249 = scalar_select %p248, %s27, 0
        %s250 = scalar_lea.vmem %s2, %s249
        %p251 = scmp.eq.s32.totalorder %s28, 0
        // Predicated region
        $region41: #{tpu_custom_call.1} parent=31 // pred_check
          %p252 = pneg %p251
        $region42: #{tpu_custom_call.1} parent=31 // pred_check_branch
          %254 = sbr.rel (%p252) target = $region44
        $region43: #{tpu_custom_call.1} parent=31 // pred_region
          %vm255 = vcmask 785408
          %256 = vst.msk [vmem:[#allocation2] sm:$0xff] %vm255, 0.0
        $region44: #{tpu_custom_call.1} parent=31 // pred_fallthru
          _
        %v257 = vld [vmem:[#allocation2] sm:$0xff]
        %v258 = vld [vmem:[%s217] sm:$0xff]
        %v259 = vld [vmem:[#allocation6] sm:$0xff]
        %v260 = vld [vmem:[#allocation6 + $0x8] sm:$0xff]
        %v261 = vld [vmem:[#allocation6 + $0x10] sm:$0xff]
        %v262 = vld [vmem:[#allocation6 + $0x18] sm:$0xff]
        %vm263 = vcmask 261120
        %v265 = vsel %vm263, %v258, 0
        %267 = vmatprep.subr.mxu0 0.0
        %268 = vmatpush1.msra.mxu0 %v259
        %269 = vmatprep.subr.mxu0 0.0
        %270 = vmatpush1.msra.mxu0 %v260
        %271 = vmatprep.subr.mxu0 0.0
        %272 = vmatpush1.msra.mxu0 %v261
        %273 = vmatprep.subr.mxu0 0.0
        %274 = vmatpush1.msra.mxu0 %v262
        %275 = vmatprep.subr.mxu0 0.0
        %276 = vmatpush1.msra.mxu0 0.0
        %277 = vmatprep.subr.mxu0 0.0
        %278 = vmatpush1.msra.mxu0 0.0
        %279 = vmatprep.subr.mxu0 0.0
        %280 = vmatpush1.msra.mxu0 0.0
        %281 = vmatprep.subr.mxu0 0.0
        %282 = vmatpush1.msra.mxu0 0.0
        %283 = vmatprep.subr.mxu0 0.0
        %284 = vmatpush1.msra.mxu0 0.0
        %285 = vmatprep.subr.mxu0 0.0
        %286 = vmatpush1.msra.mxu0 0.0
        %287 = vmatprep.subr.mxu0 0.0
        %288 = vmatpush1.msra.mxu0 0.0
        %289 = vmatprep.subr.mxu0 0.0
        %290 = vmatpush1.msra.mxu0 0.0
        %291 = vmatprep.subr.mxu0 0.0
        %292 = vmatpush1.msra.mxu0 0.0
        %293 = vmatprep.subr.mxu0 0.0
        %294 = vmatpush1.msra.mxu0 0.0
        %295 = vmatprep.subr.mxu0 0.0
        %296 = vmatpush1.msra.mxu0 0.0
        %297 = vmatprep.subr.mxu0 0.0
        %298 = vmatpush1.msra.mxu0 0.0
        %299 = vmatprep.subr.mxu0 0.0
        %300 = vmatpush1.msra.mxu0 0.0
        %301 = vmatprep.subr.mxu0 0.0
        %302 = vmatpush1.msra.mxu0 0.0
        %303 = vmatprep.subr.mxu0 0.0
        %304 = vmatpush1.msra.mxu0 0.0
        %305 = vmatprep.subr.mxu0 0.0
        %306 = vmatpush1.msra.mxu0 0.0
        %307 = vmatprep.subr.mxu0 0.0
        %308 = vmatpush1.msra.mxu0 0.0
        %309 = vmatprep.subr.mxu0 0.0
        %310 = vmatpush1.msra.mxu0 0.0
        %311 = vmatprep.subr.mxu0 0.0
        %312 = vmatpush1.msra.mxu0 0.0
        %313 = vmatprep.subr.mxu0 0.0
        %314 = vmatpush1.msra.mxu0 0.0
        %315 = vmatprep.subr.mxu0 0.0
        %316 = vmatpush1.msra.mxu0 0.0
        %317 = vmatprep.subr.mxu0 0.0
        %318 = vmatpush1.msra.mxu0 0.0
        %319 = vmatprep.subr.mxu0 0.0
        %320 = vmatpush1.msra.mxu0 0.0
        %321 = vmatprep.subr.mxu0 0.0
        %322 = vmatpush1.msra.mxu0 0.0
        %323 = vmatprep.subr.mxu0 0.0
        %324 = vmatpush1.msra.mxu0 0.0
        %325 = vmatprep.subr.mxu0 0.0
        %326 = vmatpush1.msra.mxu0 0.0
        %327 = vmatprep.subr.mxu0 0.0
        %328 = vmatpush1.msra.mxu0 0.0
        %329 = vmatprep.subr.mxu0 0.0
        %330 = vmatpush1.msra.mxu0 0.0
        %331 = vmatprep.mubr.f32.mxu0 0.0
        %332 = vmatmul.mubr.f32.gmra.mrb[0].mxu0 %v265
        %v333 = vpop.f32.mrb[0].mxu0
        %v334 = vadd.f32 0.0, %v333
        %v335 = vpop.f32.mrb[0].mxu0
        %336 = vdwg.mxu0
        %v337 = vadd.f32 %v257, %v334
        %vm338 = vcmask 785408
        %339 = vst.msk [vmem:[#allocation2] sm:$0xff] %vm338, %v337
        // Predicated region
        $region45: #{tpu_custom_call.1} parent=31 // pred_check
          %p340 = pneg %p251
        $region46: #{tpu_custom_call.1} parent=31 // pred_check_branch
          %342 = sbr.rel (%p340) target = $region48
        $region47: #{tpu_custom_call.1} parent=31 // pred_region
          %v343 = vld [vmem:[#allocation2] sm:$0xff]
          %v344 = vld [vmem:[%s250] sm:$0x1]
          %v346 = vlaneseq
          %v347 = vshrl.u32 %v346, 7
          %v348 = vsub.s32 0, %v347
          %v349 = vrot.slane %v344, %v348
          %v351 = vadd.f32 %v343, %v349
          %352 = vst.msk [vmem:[%s246] sm:$0xff] %vm338, %v351
        $region48: #{tpu_custom_call.1} parent=31 // pred_fallthru
          _
        %s353 = sand.u32 %s132, 1
        %s354 = scalar_lea.sflag [#allocation5], %s353
        %s355 = sand.u32 %s132, 1
        %s356 = smul.addr %s355, 8
        %s357 = scalar_lea.vmem [#allocation8], %s356
        // Predicated region
        $region49: #{tpu_custom_call.1} parent=31 // pred_check
          %p358 = pneg %p142
        $region50: #{tpu_custom_call.1} parent=31 // pred_check_branch
          %360 = sbr.rel (%p358) target = $region52
        $region51: #{tpu_custom_call.1} parent=31 // pred_region
          %s362 = ssub.s32 128, 128
          %363 = vsyncadd %s354, %s362
          %s364 = sadd.s32 %s27, %s26
          %s365 = smul.addr %s364, 128
          %s366 = scalar_lea.hbm %s3, %s365
          %s368 = sshll.u32 %s357, 4
          %s369 = int_to_ptr.vmem [resolvable:$true] %s368
          %371 = dma.vmem_to_hbm [thread:$0]  %s369, 128, %s366, %s354
        $region52: #{tpu_custom_call.1} parent=31 // pred_fallthru
          _
      $region32: #{tpu_custom_call.1} parent=5 // pred_fallthru
        _
      %p372 = scmp.le.s32.totalorder 2, %s16
      // Predicated region
      $region53: #{tpu_custom_call.1} parent=5 // pred_check
        %p373 = pneg %p372
      $region54: #{tpu_custom_call.1} parent=5 // pred_check_branch
        %375 = sbr.rel (%p373) target = $region56
      $region55: #{tpu_custom_call.1} parent=5 // pred_region
        %s376 = ssub.s32 %s16, 2
        // Predicated region
        $region57: #{tpu_custom_call.1} parent=55 // pred_check
          %p377 = pneg %p148
        $region58: #{tpu_custom_call.1} parent=55 // pred_check_branch
          %379 = sbr.rel (%p377) target = $region60
        $region59: #{tpu_custom_call.1} parent=55 // pred_region
          %s380 = sand.u32 %s133, 1
          %s381 = scalar_lea.sflag [#allocation5], %s380
          %s382 = sand.u32 %s133, 1
          %s383 = smul.addr %s382, 8
          %s384 = scalar_lea.vmem [#allocation8], %s383
          %385 = dma.done %s381, 128
        $region60: #{tpu_custom_call.1} parent=55 // pred_fallthru
          _
      $region56: #{tpu_custom_call.1} parent=5 // pred_fallthru
        _
    $region6: #{tpu_custom_call.1} parent=1 // loop_footer
      %s20 = sadd.s32 1, %s16
    $region7: #{tpu_custom_call.1} parent=1 // loop_footer_branch
      %15 = sbr.rel target = $region3
    $region8: #{tpu_custom_call.1} parent=1 // loop_exit
      _
    %386 = vsyncpa [#allocation4], 1
    %s387 = scalar_lea.sflag [#allocation4], 1
    %388 = vsyncpa %s387, 1
    %389 = vsyncpa [#allocation7], 1
    %390 = vsyncpa [#allocation5], 1
    %s391 = scalar_lea.sflag [#allocation5], 1
    %392 = vsyncpa %s391, 1

</llo_original>
